<compile_context>
chip_gen: v5e
topology: v5e:2x2
jax: 0.10.0
libtpu: 0.0.40
codegen_flags: <defaults>
</compile_context>

<pallas_src>
import jax
import jax.numpy as jnp
from jax.experimental import pallas as pl
from jax.experimental.pallas import tpu as pltpu


def similarity_kernel(l_ref, r_ref, wh_ref, bh_ref, wp_ref, bp_ref, out_ref):
    # Elementwise feature construction on the VPU, in f32 (v5e has no bf16 VALUs).
    l = l_ref[...]                       # (TB, D)   D = 2*mem_dim
    r = r_ref[...]
    mult = l * r
    absd = jnp.abs(l - r)

    # entail = [mult | absd | lvec | rvec]  -> single K = 4*D matmul on the MXU.
    entail = jnp.concatenate([mult, absd, l, r], axis=1)          # (TB, 4*D), f32

    h = jnp.dot(entail.astype(jnp.bfloat16), wh_ref[...],
                preferred_element_type=jnp.float32) + bh_ref[...]
    h = jax.nn.sigmoid(h)                                          # (TB, hidden), f32

    o = jnp.dot(h.astype(jnp.bfloat16), wp_ref[...],
                preferred_element_type=jnp.float32) + bp_ref[...]
    out_ref[...] = o                                               # (TB, 2)


def similarity_forward(lvec, rvec, wh, bh, wp, bp, *, block_b=512):
    """lvec/rvec: (B, 2*mem_dim) f32
       wh: (8*mem_dim, hidden_dim), bh: (1, hidden_dim)
       wp: (mem_dim, 2),            bp: (1, 2)
       Weights may be any float dtype; they are cast to bf16 for the MXU."""
    B, D = lvec.shape
    K, H = wh.shape
    assert K == 4 * D, "wh must have 8*mem_dim input features"
    # Implicit requirement of the PyTorch module: hidden_dim == mem_dim.
    assert wp.shape[0] == H, "Similarity requires hidden_dim == mem_dim (wp in_features)"
    n_out = wp.shape[1]

    def round_up(x, m):
        return (x + m - 1) // m * m

    # Batch tile: as large as comfortably fits VMEM (weights are ~tens of KB,
    # per-row traffic ~hundreds of bytes, so even TB=512 is nowhere near the limit).
    tb = min(block_b, round_up(B, 8))
    b_padded = round_up(B, tb)
    if b_padded != B:
        pad = ((0, b_padded - B), (0, 0))
        lvec = jnp.pad(lvec, pad)
        rvec = jnp.pad(rvec, pad)
    grid = (b_padded // tb,)

    # Halve weight DMA traffic; keep biases in f32.
    wh_bf = wh.astype(jnp.bfloat16)
    wp_bf = wp.astype(jnp.bfloat16)
    bh_f32 = bh.astype(jnp.float32)
    bp_f32 = bp.astype(jnp.float32)

    cost = pl.CostEstimate(
        flops=2 * B * K * H + 2 * B * H * n_out,
        transcendentals=B * H,                         # sigmoid
        bytes_accessed=(B * (2 * D + n_out) * 4        # lvec, rvec, out (f32)
                        + wh_bf.size * 2 + wp_bf.size * 2
                        + bh_f32.size * 4 + bp_f32.size * 4),
    )

    batched = lambda a: pl.BlockSpec((tb, a.shape[1]), lambda i: (i, 0))
    resident = lambda a: pl.BlockSpec(a.shape, lambda i: (0, 0))

    out = pl.pallas_call(
        similarity_kernel,
        out_shape=jax.ShapeDtypeStruct((b_padded, n_out), jnp.float32),
        grid=grid,
        in_specs=[batched(lvec), batched(rvec),
                  resident(wh_bf), resident(bh_f32),
                  resident(wp_bf), resident(bp_f32)],
        out_specs=pl.BlockSpec((tb, n_out), lambda i: (i, 0)),
        compiler_params=pltpu.CompilerParams(
            dimension_semantics=("parallel",)),
        cost_estimate=cost,
    )(lvec, rvec, wh_bf, bh_f32, wp_bf, bp_f32)
    return out[:B]


def reference_forward(lvec, rvec, wh, bh, wp, bp):
    mult = lvec * rvec
    absd = jnp.abs(lvec - rvec)
    entail = jnp.concatenate([mult, absd, lvec, rvec], axis=1)
    h = jax.nn.sigmoid(entail @ wh + bh)
    return h @ wp + bp


if __name__ == "__main__":
    mem_dim = 32
    hidden_dim = 32          # final Linear(mem_dim, 2) requires hidden_dim == mem_dim
    D = 2 * mem_dim          # lvec / rvec feature width

    key = jax.random.PRNGKey(0)
    k1, k2, k3, k4, k5, k6 = jax.random.split(key, 6)

    # Deterministic parameters (stored as (in, out), i.e. PyTorch weight.T).
    wh = jax.random.normal(k3, (8 * mem_dim, hidden_dim), dtype=jnp.float32) * 0.05
    bh = jax.random.normal(k4, (1, hidden_dim), dtype=jnp.float32) * 0.05
    wp = jax.random.normal(k5, (mem_dim, 2), dtype=jnp.float32) * 0.05
    bp = jax.random.normal(k6, (1, 2), dtype=jnp.float32) * 0.05

    # Case 1: small batch (single grid step).
    B = 8
    lvec = jax.random.normal(k1, (B, D), dtype=jnp.float32)
    rvec = jax.random.normal(k2, (B, D), dtype=jnp.float32)
    out = similarity_forward(lvec, rvec, wh, bh, wp, bp)
    jax.block_until_ready(out)
    ref = reference_forward(lvec, rvec, wh, bh, wp, bp)
    assert out.shape == (B, 2)
    # bf16 MXU inputs (f32 accumulation) -> compare against f32 reference with a
    # bf16-appropriate tolerance.
    assert jnp.allclose(out, ref, atol=2e-2, rtol=2e-2), \
        f"max abs err {float(jnp.max(jnp.abs(out - ref)))}"

    # Case 2: batch not a multiple of the tile (exercises grid + padding path).
    B2 = 300
    l2 = jax.random.normal(jax.random.PRNGKey(7), (B2, D), dtype=jnp.float32)
    r2 = jax.random.normal(jax.random.PRNGKey(8), (B2, D), dtype=jnp.float32)
    out2 = similarity_forward(l2, r2, wh, bh, wp, bp, block_b=128)
    jax.block_until_ready(out2)
    ref2 = reference_forward(l2, r2, wh, bh, wp, bp)
    assert out2.shape == (B2, 2)
    assert jnp.allclose(out2, ref2, atol=2e-2, rtol=2e-2), \
        f"max abs err {float(jnp.max(jnp.abs(out2 - ref2)))}"

    print("KERNEL_OK")
</pallas_src>

<mosaic_0001>
module attributes {stable_mosaic.version = 11 : i64} {
  func.func @similarity_kernel(%arg0: i32, %arg1: memref<8x64xf32, #tpu.memory_space<vmem>>, %arg2: memref<8x64xf32, #tpu.memory_space<vmem>>, %arg3: memref<256x32xbf16, #tpu.memory_space<vmem>>, %arg4: memref<1x32xf32, #tpu.memory_space<vmem>>, %arg5: memref<32x2xbf16, #tpu.memory_space<vmem>>, %arg6: memref<1x2xf32, #tpu.memory_space<vmem>>, %arg7: memref<8x2xf32, #tpu.memory_space<vmem>>) attributes {dimension_semantics = [#tpu.dimension_semantics<parallel>], iteration_bounds = array<i64: 1>, scalar_prefetch = 0 : i64, scratch_operands = 0 : i64, tpu.core_type = #tpu.core_type<tc>, window_params = [{transform_indices = @transform_0, window_bounds = array<i64: 8, 64>}, {transform_indices = @transform_1, window_bounds = array<i64: 8, 64>}, {pipeline_mode = #tpu.pipeline_mode<synchronous>, transform_indices = @transform_2, window_bounds = array<i64: 256, 32>}, {pipeline_mode = #tpu.pipeline_mode<synchronous>, transform_indices = @transform_3, window_bounds = array<i64: 1, 32>}, {pipeline_mode = #tpu.pipeline_mode<synchronous>, transform_indices = @transform_4, window_bounds = array<i64: 32, 2>}, {pipeline_mode = #tpu.pipeline_mode<synchronous>, transform_indices = @transform_5, window_bounds = array<i64: 1, 2>}, {transform_indices = @transform_6, window_bounds = array<i64: 8, 2>}]} {
    %c0 = arith.constant 0 : index
    %c0_0 = arith.constant 0 : index
    %0 = vector.load %arg1[%c0, %c0_0] : memref<8x64xf32, #tpu.memory_space<vmem>>, vector<8x64xf32>
    %c0_1 = arith.constant 0 : index
    %c0_2 = arith.constant 0 : index
    %1 = vector.load %arg2[%c0_1, %c0_2] : memref<8x64xf32, #tpu.memory_space<vmem>>, vector<8x64xf32>
    %2 = arith.mulf %0, %1 : vector<8x64xf32>
    %3 = arith.subf %0, %1 : vector<8x64xf32>
    %4 = math.absf %3 : vector<8x64xf32>
    %5 = tpu.concatenate %2, %4, %0, %1 in 1 : vector<8x64xf32>, vector<8x64xf32>, vector<8x64xf32>, vector<8x64xf32> -> vector<8x256xf32>
    %6 = arith.truncf %5 : vector<8x256xf32> to vector<8x256xbf16>
    %c0_3 = arith.constant 0 : index
    %c0_4 = arith.constant 0 : index
    %7 = vector.load %arg3[%c0_3, %c0_4] : memref<256x32xbf16, #tpu.memory_space<vmem>>, vector<256x32xbf16>
    %cst = arith.constant dense<0.000000e+00> : vector<8x32xf32>
    %8 = tpu.matmul %6, %7, %cst {dimension_numbers = #tpu.dot_dimension_numbers<[1], [0], [0], [1], [0, 0, 1, 1], [], []>} : vector<8x256xbf16>, vector<256x32xbf16>, vector<8x32xf32> -> vector<8x32xf32>
    %c0_5 = arith.constant 0 : index
    %c0_6 = arith.constant 0 : index
    %9 = vector.load %arg4[%c0_5, %c0_6] : memref<1x32xf32, #tpu.memory_space<vmem>>, vector<1x32xf32>
    %10 = vector.broadcast %9 : vector<1x32xf32> to vector<8x32xf32>
    %11 = arith.addf %8, %10 : vector<8x32xf32>
    %12 = arith.negf %11 : vector<8x32xf32>
    %13 = math.exp %12 : vector<8x32xf32>
    %cst_7 = arith.constant 1.000000e+00 : f32
    %14 = vector.broadcast %cst_7 : f32 to vector<8x32xf32>
    %15 = arith.addf %14, %13 : vector<8x32xf32>
    %16 = arith.divf %14, %15 : vector<8x32xf32>
    %17 = arith.truncf %16 : vector<8x32xf32> to vector<8x32xbf16>
    %c0_8 = arith.constant 0 : index
    %c0_9 = arith.constant 0 : index
    %18 = vector.load %arg5[%c0_8, %c0_9] : memref<32x2xbf16, #tpu.memory_space<vmem>>, vector<32x2xbf16>
    %cst_10 = arith.constant dense<0.000000e+00> : vector<8x2xf32>
    %19 = tpu.matmul %17, %18, %cst_10 {dimension_numbers = #tpu.dot_dimension_numbers<[1], [0], [0], [1], [0, 0, 1, 1], [], []>} : vector<8x32xbf16>, vector<32x2xbf16>, vector<8x2xf32> -> vector<8x2xf32>
    %c0_11 = arith.constant 0 : index
    %c0_12 = arith.constant 0 : index
    %20 = vector.load %arg6[%c0_11, %c0_12] : memref<1x2xf32, #tpu.memory_space<vmem>>, vector<1x2xf32>
    %21 = vector.broadcast %20 : vector<1x2xf32> to vector<8x2xf32>
    %22 = arith.addf %19, %21 : vector<8x2xf32>
    %c0_13 = arith.constant 0 : index
    %c0_14 = arith.constant 0 : index
    %23 = vector.load %arg7[%c0_13, %c0_14] : memref<8x2xf32, #tpu.memory_space<vmem>>, vector<8x2xf32>
    tpu.vector_store %arg7[%c0_13, %c0_14], %22 {strides = array<i32>} : memref<8x2xf32, #tpu.memory_space<vmem>>, vector<8x2xf32>,
    return
  }
  func.func @transform_0(%arg0: i32) -> (i32, i32) {
    %c0_i32 = arith.constant 0 : i32
    %c0_i32_0 = arith.constant 0 : i32
    return %arg0, %c0_i32 : i32, i32
  }
  func.func @transform_1(%arg0: i32) -> (i32, i32) {
    %c0_i32 = arith.constant 0 : i32
    %c0_i32_0 = arith.constant 0 : i32
    return %arg0, %c0_i32 : i32, i32
  }
  func.func @transform_2(%arg0: i32) -> (i32, i32) {
    %c0_i32 = arith.constant 0 : i32
    %c0_i32_0 = arith.constant 0 : i32
    %c0_i32_1 = arith.constant 0 : i32
    return %c0_i32, %c0_i32_0 : i32, i32
  }
  func.func @transform_3(%arg0: i32) -> (i32, i32) {
    %c0_i32 = arith.constant 0 : i32
    %c0_i32_0 = arith.constant 0 : i32
    %c0_i32_1 = arith.constant 0 : i32
    return %c0_i32, %c0_i32_0 : i32, i32
  }
  func.func @transform_4(%arg0: i32) -> (i32, i32) {
    %c0_i32 = arith.constant 0 : i32
    %c0_i32_0 = arith.constant 0 : i32
    %c0_i32_1 = arith.constant 0 : i32
    return %c0_i32, %c0_i32_0 : i32, i32
  }
  func.func @transform_5(%arg0: i32) -> (i32, i32) {
    %c0_i32 = arith.constant 0 : i32
    %c0_i32_0 = arith.constant 0 : i32
    %c0_i32_1 = arith.constant 0 : i32
    return %c0_i32, %c0_i32_0 : i32, i32
  }
  func.func @transform_6(%arg0: i32) -> (i32, i32) {
    %c0_i32 = arith.constant 0 : i32
    %c0_i32_0 = arith.constant 0 : i32
    return %arg0, %c0_i32 : i32, i32
  }
}

</mosaic_0001>

<llo_original>
// kernel: tpu_custom_call.1
$region0: #{tpu_custom_call.1}
  #allocation0 [shape = 'u32[]', space=smem, size = 0x4, offset = 0x4, fixed_abs, tag = 'smem constant byte address 0x4 - core index']
  #allocation1 [shape = 'u32[72,128]{1,0:T(1,128)}', space=vmem, size = 0x9000, scoped, tag = 'internal scratch']
  %s0 = inlined_call_operand.vmem [shape: f32[8,64], index: 0, kind: input, shape index: {}]
  %s1 = inlined_call_operand.vmem [shape: f32[8,64], index: 1, kind: input, shape index: {}]
  %s2 = inlined_call_operand.vmem [shape: bf16[256,32], index: 2, kind: input, shape index: {}]
  %s3 = inlined_call_operand.vmem [shape: f32[1,32], index: 3, kind: input, shape index: {}]
  %s4 = inlined_call_operand.vmem [shape: bf16[32,2], index: 4, kind: input, shape index: {}]
  %s5 = inlined_call_operand.vmem [shape: f32[1,2], index: 5, kind: input, shape index: {}]
  %s6 = inlined_call_operand.vmem [shape: f32[8,2], index: 6, kind: output, shape index: {}]
  %s7 = sld [smem:[#allocation0]]
  $region34: #{tpu_custom_call.1} parent=0
    _
  %s9 = ssub.s32 1, %s7
  %s10 = scalar_select 0, %s9, %s7
  // Predicated region
  $region2: #{tpu_custom_call.1} parent=0 // pred_check
    _
  $region3: #{tpu_custom_call.1} parent=0 // pred_check_branch
    %12 = sbr.rel (0) target = $region5
  $region4: #{tpu_custom_call.1} parent=0 // pred_region
    _
  $region5: #{tpu_custom_call.1} parent=0 // pred_fallthru
    _
  // Predicated region
  $region6: #{tpu_custom_call.1} parent=0 // pred_check
    _
  $region7: #{tpu_custom_call.1} parent=0 // pred_check_branch
    %14 = sbr.rel (0) target = $region9
  $region8: #{tpu_custom_call.1} parent=0 // pred_region
    _
  $region9: #{tpu_custom_call.1} parent=0 // pred_fallthru
    _
  // Predicated region
  $region10: #{tpu_custom_call.1} parent=0 // pred_check
    _
  $region11: #{tpu_custom_call.1} parent=0 // pred_check_branch
    %16 = sbr.rel (0) target = $region13
  $region12: #{tpu_custom_call.1} parent=0 // pred_region
    _
  $region13: #{tpu_custom_call.1} parent=0 // pred_fallthru
    _
  // Predicated region
  $region14: #{tpu_custom_call.1} parent=0 // pred_check
    _
  $region15: #{tpu_custom_call.1} parent=0 // pred_check_branch
    %18 = sbr.rel (0) target = $region17
  $region16: #{tpu_custom_call.1} parent=0 // pred_region
    _
  $region17: #{tpu_custom_call.1} parent=0 // pred_fallthru
    _
  // Predicated region
  $region18: #{tpu_custom_call.1} parent=0 // pred_check
    _
  $region19: #{tpu_custom_call.1} parent=0 // pred_check_branch
    %20 = sbr.rel (0) target = $region21
  $region20: #{tpu_custom_call.1} parent=0 // pred_region
    _
  $region21: #{tpu_custom_call.1} parent=0 // pred_fallthru
    _
  // Predicated region
  $region22: #{tpu_custom_call.1} parent=0 // pred_check
    _
  $region23: #{tpu_custom_call.1} parent=0 // pred_check_branch
    %22 = sbr.rel (0) target = $region25
  $region24: #{tpu_custom_call.1} parent=0 // pred_region
    _
  $region25: #{tpu_custom_call.1} parent=0 // pred_fallthru
    _
  %v24 = vld [vmem:[%s0] sm:$0xff]
  %v25 = vld [vmem:[%s1] sm:$0xff]
  %v26 = vmul.f32 %v24, %v25
  %v27 = vsub.f32 %v24, %v25
  %v28 = vand.u32 2147483647, %v27
  %30 = vrot.lane.b32.xlu0 %v28, 64
  %v31 = vpop.permute.xlu0 %30
  %34 = vrot.lane.b32.xlu0 %v25, 64
  %v35 = vpop.permute.xlu0 %34
  %vm37 = vcmask 523264
  %v38 = vsel %vm37, %v26, %v31
  %v39 = vsel %vm37, %v24, %v35
  %v40 = vpack.c.bf16 %v38, %v38
  %v41 = vpack.c.bf16 %v39, %v39
  %v42 = vld [vmem:[%s2] sm:$0xf]
  %v43 = vld [vmem:[%s2 + $0x4] sm:$0xf]
  %v44 = vld [vmem:[%s2 + $0x8] sm:$0xf]
  %v45 = vld [vmem:[%s2 + $0xc] sm:$0xf]
  %v46 = vld [vmem:[%s2 + $0x10] sm:$0xf]
  %v47 = vld [vmem:[%s2 + $0x14] sm:$0xf]
  %v48 = vld [vmem:[%s2 + $0x18] sm:$0xf]
  %v49 = vld [vmem:[%s2 + $0x1c] sm:$0xf]
  %v50 = vld [vmem:[%s2 + $0x20] sm:$0xf]
  %v51 = vld [vmem:[%s2 + $0x24] sm:$0xf]
  %v52 = vld [vmem:[%s2 + $0x28] sm:$0xf]
  %v53 = vld [vmem:[%s2 + $0x2c] sm:$0xf]
  %v54 = vld [vmem:[%s2 + $0x30] sm:$0xf]
  %v55 = vld [vmem:[%s2 + $0x34] sm:$0xf]
  %v56 = vld [vmem:[%s2 + $0x38] sm:$0xf]
  %v57 = vld [vmem:[%s2 + $0x3c] sm:$0xf]
  %v58 = vld [vmem:[%s2 + $0x40] sm:$0xf]
  %v59 = vld [vmem:[%s2 + $0x44] sm:$0xf]
  %v60 = vld [vmem:[%s2 + $0x48] sm:$0xf]
  %v61 = vld [vmem:[%s2 + $0x4c] sm:$0xf]
  %v62 = vld [vmem:[%s2 + $0x50] sm:$0xf]
  %v63 = vld [vmem:[%s2 + $0x54] sm:$0xf]
  %v64 = vld [vmem:[%s2 + $0x58] sm:$0xf]
  %v65 = vld [vmem:[%s2 + $0x5c] sm:$0xf]
  %v66 = vld [vmem:[%s2 + $0x60] sm:$0xf]
  %v67 = vld [vmem:[%s2 + $0x64] sm:$0xf]
  %v68 = vld [vmem:[%s2 + $0x68] sm:$0xf]
  %v69 = vld [vmem:[%s2 + $0x6c] sm:$0xf]
  %v70 = vld [vmem:[%s2 + $0x70] sm:$0xf]
  %v71 = vld [vmem:[%s2 + $0x74] sm:$0xf]
  %v72 = vld [vmem:[%s2 + $0x78] sm:$0xf]
  %v73 = vld [vmem:[%s2 + $0x7c] sm:$0xf]
  %v74 = vld [vmem:[%s3] sm:$0x1]
  %v76 = vperm.slane %v74, 0
  %v110 = vunpack.c.l.b16 %v42
  %v111 = vunpack.c.l.b16 %v43
  %v112 = vunpack.c.l.b16 %v44
  %v113 = vunpack.c.l.b16 %v45
  %v114 = vunpack.c.l.b16 %v46
  %v115 = vunpack.c.l.b16 %v47
  %v116 = vunpack.c.l.b16 %v48
  %v117 = vunpack.c.l.b16 %v49
  %v118 = vunpack.c.l.b16 %v50
  %v119 = vunpack.c.l.b16 %v51
  %v120 = vunpack.c.l.b16 %v52
  %v121 = vunpack.c.l.b16 %v53
  %v122 = vunpack.c.l.b16 %v54
  %v123 = vunpack.c.l.b16 %v55
  %v124 = vunpack.c.l.b16 %v56
  %v125 = vunpack.c.l.b16 %v57
  %v126 = vunpack.c.l.b16 %v58
  %v127 = vunpack.c.l.b16 %v59
  %v128 = vunpack.c.l.b16 %v60
  %v129 = vunpack.c.l.b16 %v61
  %v130 = vunpack.c.l.b16 %v62
  %v131 = vunpack.c.l.b16 %v63
  %v132 = vunpack.c.l.b16 %v64
  %v133 = vunpack.c.l.b16 %v65
  %v134 = vunpack.c.l.b16 %v66
  %v135 = vunpack.c.l.b16 %v67
  %v136 = vunpack.c.l.b16 %v68
  %v137 = vunpack.c.l.b16 %v69
  %v138 = vunpack.c.l.b16 %v70
  %v139 = vunpack.c.l.b16 %v71
  %v140 = vunpack.c.l.b16 %v72
  %v141 = vunpack.c.l.b16 %v73
  %v142 = vpack.c.b16 %v111, %v110
  %v143 = vpack.c.b16 %v113, %v112
  %v144 = vpack.c.b16 %v115, %v114
  %v145 = vpack.c.b16 %v117, %v116
  %v146 = vpack.c.b16 %v119, %v118
  %v147 = vpack.c.b16 %v121, %v120
  %v148 = vpack.c.b16 %v123, %v122
  %v149 = vpack.c.b16 %v125, %v124
  %v150 = vpack.c.b16 %v127, %v126
  %v151 = vpack.c.b16 %v129, %v128
  %v152 = vpack.c.b16 %v131, %v130
  %v153 = vpack.c.b16 %v133, %v132
  %v154 = vpack.c.b16 %v135, %v134
  %v155 = vpack.c.b16 %v137, %v136
  %v156 = vpack.c.b16 %v139, %v138
  %v157 = vpack.c.b16 %v141, %v140
  %174 = vmatpush.bf16.msra.mxu0 %v149
  %175 = vmatpush.bf16.msra.mxu0 %v148
  %176 = vmatpush.bf16.msra.mxu0 %v147
  %177 = vmatpush.bf16.msra.mxu0 %v146
  %178 = vmatpush.bf16.msra.mxu0 %v145
  %179 = vmatpush.bf16.msra.mxu0 %v144
  %180 = vmatpush.bf16.msra.mxu0 %v143
  %181 = vmatpush.bf16.msra.mxu0 %v142
  %182 = vmatmul.bf16.gmra.mxu0 %v40
  %v183 = vpop.f32.mrf.mxu0
  %v184 = vadd.f32 %v76, %v183
  %v185 = vpop.f32.mrf.mxu0
  %186 = vdwg.mxu0
  %187 = vmatpush.bf16.msra.mxu0 %v157
  %188 = vmatpush.bf16.msra.mxu0 %v156
  %189 = vmatpush.bf16.msra.mxu0 %v155
  %190 = vmatpush.bf16.msra.mxu0 %v154
  %191 = vmatpush.bf16.msra.mxu0 %v153
  %192 = vmatpush.bf16.msra.mxu0 %v152
  %193 = vmatpush.bf16.msra.mxu0 %v151
  %194 = vmatpush.bf16.msra.mxu0 %v150
  %195 = vmatmul.bf16.gmra.mxu0 %v41
  %v196 = vpop.f32.mrf.mxu0
  %v197 = vadd.f32 %v184, %v196
  %v198 = vpop.f32.mrf.mxu0
  %199 = vdwg.mxu0
  %v200 = vxor.u32 %v197, 2147483648
  %v201 = vmul.f32 %v200, 1.442695
  %v202 = vpow.pop %v201
  %v203 = vadd.f32 %v202, 1.0
  %v204 = vrcp.pop %v203
  %v205 = vmul.f32 %v203, %v204
  %v206 = vsub.f32 1.0, %v205
  %v207 = vmul.f32 %v204, %v206
  %v208 = vadd.f32 %v204, %v207
  %vm209 = vweird.f32 %v203
  %vm210 = vweird.f32 %v204
  %vm211 = vmor %vm209, %vm210
  %v212 = vsel %vm211, %v204, %v208
  %v213 = vand.u32 2147483647, %v203
  %vm214 = vcmp.eq.f32.partialorder %v213, 8.507059e+37
  %v215 = vand.u32 %v203, 2147483648
  %v216 = vor.u32 1.1754944e-38, %v215
  %v217 = vsel %vm214, %v216, %v212
  %v218 = vmul.f32 1.0, %v217
  %v219 = vpack.c.bf16 %v218, %v218
  %v220 = vld [vmem:[%s4] sm:$0xf]
  %v221 = vld [vmem:[%s4 + $0x4] sm:$0xf]
  %v222 = vld [vmem:[%s4 + $0x8] sm:$0xf]
  %v223 = vld [vmem:[%s4 + $0xc] sm:$0xf]
  %v224 = vld [vmem:[%s5] sm:$0x1]
  %v226 = vperm.slane %v224, 0
  %v232 = vunpack.c.l.b16 %v220
  %v233 = vunpack.c.l.b16 %v221
  %v234 = vunpack.c.l.b16 %v222
  %v235 = vunpack.c.l.b16 %v223
  %v236 = vpack.c.b16 %v233, %v232
  %v237 = vpack.c.b16 %v235, %v234
  %vm240 = vcmask 261120
  %v242 = vsel %vm240, %v219, 0
  %244 = vmatpush.bf16.msra.mxu0 0
  %245 = vmatpush.bf16.msra.mxu0 0
  %246 = vmatpush.bf16.msra.mxu0 0
  %247 = vmatpush.bf16.msra.mxu0 0
  %248 = vmatpush.bf16.msra.mxu0 0
  %249 = vmatpush.bf16.msra.mxu0 0
  %250 = vmatpush.bf16.msra.mxu0 %v237
  %251 = vmatpush.bf16.msra.mxu0 %v236
  %252 = vmatmul.bf16.gmra.mxu0 %v242
  %v253 = vpop.f32.mrf.mxu0
  %v254 = vadd.f32 %v226, %v253
  %v255 = vpop.f32.mrf.mxu0
  %256 = vdwg.mxu0
  %vm257 = vcmask 15360
  %258 = vst.msk [vmem:[%s6] sm:$0xff] %vm257, %v254
  // Predicated region
  $region26: #{tpu_custom_call.1} parent=0 // pred_check
    _
  $region27: #{tpu_custom_call.1} parent=0 // pred_check_branch
    %260 = sbr.rel (0) target = $region29
  $region28: #{tpu_custom_call.1} parent=0 // pred_region
    _
  $region29: #{tpu_custom_call.1} parent=0 // pred_fallthru
    _
  // Predicated region
  $region30: #{tpu_custom_call.1} parent=0 // pred_check
    _
  $region31: #{tpu_custom_call.1} parent=0 // pred_check_branch
    %262 = sbr.rel (0) target = $region33
  $region32: #{tpu_custom_call.1} parent=0 // pred_region
    _
  $region33: #{tpu_custom_call.1} parent=0 // pred_fallthru
    _

</llo_original>
